<compile_context>
chip_gen: v6e
topology: v6e:2x2x1
jax: 0.10.0
libtpu: 0.0.40
codegen_flags: <defaults>
</compile_context>

<pallas_src>
import math

import jax
import jax.numpy as jnp
from jax import lax
from jax.experimental import pallas as pl
from jax.experimental.pallas import tpu as pltpu

HID = 128             # hidden_dim (lig/pro encoders, MDN_Block)
NGAUSS = 10           # n_gaussians
NATOM = 24            # atoms per residue in xyz_full
DIST_THRESHOLD = 5.0  # forward() scoring threshold
BN_EPS = 1e-5
_HALF_LOG_2PI = 0.5 * math.log(2.0 * math.pi)
_HEAD_PAD = 128       # fused mixture-head width: [pi(10) | sigma(10) | mu(10) | 0-pad]


def _elu(x):
    return jnp.where(x > 0, x, jnp.exp(jnp.minimum(x, 0)) - 1)


# ---------------------------------------------------------------------------
# Row-tiled linear kernel: y = act(x @ W + b), bf16 MXU inputs, f32 output.
# Used for (a) the encoder stand-ins and (b) the batched, BN-folded MDN
# pair-MLP projections hoisted out of the per-complex grid.
# ---------------------------------------------------------------------------
def _make_linear_kernel(activation):
    def kernel(x_ref, w_ref, b_ref, o_ref):
        y = jnp.dot(x_ref[...], w_ref[...],
                    preferred_element_type=jnp.float32) + b_ref[...]
        if activation == "silu":
            y = y * jax.nn.sigmoid(y)
        o_ref[...] = y
    return kernel


def linear(x, w, b, activation=None, tile_rows=256):
    n, f = x.shape
    fo = w.shape[1]
    tm = tile_rows if (n % tile_rows == 0) else n
    return pl.pallas_call(
        _make_linear_kernel(activation),
        out_shape=jax.ShapeDtypeStruct((n, fo), jnp.float32),
        grid=(n // tm,),
        in_specs=[
            pl.BlockSpec((tm, f), lambda i: (i, 0)),
            pl.BlockSpec((f, fo), lambda i: (0, 0)),
            pl.BlockSpec((1, fo), lambda i: (0, 0)),
        ],
        out_specs=pl.BlockSpec((tm, fo), lambda i: (i, 0)),
        compiler_params=pltpu.CompilerParams(dimension_semantics=("parallel",)),
    )(x.astype(jnp.bfloat16), w.astype(jnp.bfloat16), b.astype(jnp.float32))


# ---------------------------------------------------------------------------
# MDN scoring kernel.  Grid = (complex, ligand-tile, protein-tile).
# Implements MDN_Block.forward + calculate_probablity + (dist > 5) masking +
# scatter(sum) per complex.  The per-complex score accumulates in the
# revisited output block across the two (arbitrary) pair-tile axes.
# ---------------------------------------------------------------------------
def _mdn_score_kernel(a_l_ref, b_p_ref, lig_pos_ref, pro_pos_ref,
                      lmask_ref, pmask_ref, wh_ref, bh_ref, o_ref):
    @pl.when((pl.program_id(1) == 0) & (pl.program_id(2) == 0))
    def _():
        o_ref[...] = jnp.zeros_like(o_ref)

    a_l = a_l_ref[0]                                  # (TL, H) f32, BN+bias folded
    b_p = b_p_ref[0]                                  # (TN, H) f32, BN folded
    tl, hid = a_l.shape
    tn = b_p.shape[0]
    g = NGAUSS

    # --- pair MLP: ELU(a_l[i] + b_p[j]) on a lane-dense (TL, TN, H) tile ----
    h = _elu(a_l[:, None, :] + b_p[None, :, :])       # (TL, TN, H)
    h2 = h.reshape(tl * tn, hid).astype(jnp.bfloat16)  # (P, H) pairs on sublanes

    # --- fused mixture heads: one bf16 (H, 128) matmul (pi | sigma | mu) ----
    heads = jnp.dot(h2, wh_ref[...],
                    preferred_element_type=jnp.float32) + bh_ref[...]   # (P, 128)
    pi_logits = heads[:, 0:g]
    mx = jnp.max(pi_logits, axis=-1, keepdims=True)
    log_pi = pi_logits - (mx + jnp.log(
        jnp.sum(jnp.exp(pi_logits - mx), axis=-1, keepdims=True)))      # log-softmax
    sigma = _elu(heads[:, g:2 * g]) + 1.1                               # (P, G)
    mu = _elu(heads[:, 2 * g:3 * g]) + 1.0                              # (P, G)

    # --- pair distances: min over 24 full-atom slots, lane-dense (TL, TN) ---
    lig = lig_pos_ref[0]                              # (TL, 3)
    lx = lig[:, 0:1]
    ly = lig[:, 1:2]
    lz = lig[:, 2:3]

    def atom_body(a, dmin):
        pxyz = pro_pos_ref[a]                         # (3, TN), residues on lanes
        dx = lx - pxyz[0:1, :]
        dy = ly - pxyz[1:2, :]
        dz = lz - pxyz[2:3, :]
        d2 = dx * dx + dy * dy + dz * dz
        # NaN-padded (missing) atoms -> 10000, matching torch.nan_to_num(.,10000)
        d = jnp.where(d2 >= 0.0, jnp.sqrt(d2), 10000.0)
        return jnp.minimum(dmin, d)

    dmin = lax.fori_loop(0, NATOM, atom_body,
                         jnp.full((tl, tn), 1e10, jnp.float32), unroll=4)

    # valid-pair (C_mask) handling: push invalid pairs beyond the threshold so
    # a single (dist <= 5) test performs both the C_mask and distance cut.
    valid = lmask_ref[0] * pmask_ref[0]               # (TL,1)*(1,TN) -> (TL, TN)
    dmin = jnp.where(valid > 0.0, dmin, 1e6)

    # single small relayout: pair distances into the pairs-on-sublanes layout
    dflat = dmin.reshape(tl * tn, 1)                  # (P, 1)

    # --- mixture probability + scatter-sum into the per-complex score -------
    inv_sigma = pl.reciprocal(sigma, approx=True)
    z = (dflat - mu) * inv_sigma
    logprob = log_pi - jnp.log(sigma) - _HALF_LOG_2PI - 0.5 * z * z     # (P, G)
    prob = jnp.sum(jnp.exp(logprob), axis=-1, keepdims=True)            # (P, 1)
    prob = jnp.where(dflat <= DIST_THRESHOLD, prob, 0.0)
    o_ref[...] = o_ref[...] + jnp.sum(prob)


def mdn_score(a_l, b_p, lig_pos, pro_pos_cn, lig_mask, pro_mask_row,
              w_heads, b_heads, tile_l=None, tile_t=None):
    B, NL, H = a_l.shape
    NT = b_p.shape[1]
    TL = NL if tile_l is None else tile_l
    TN = NT if tile_t is None else tile_t
    assert NL % TL == 0 and NT % TN == 0

    out = pl.pallas_call(
        _mdn_score_kernel,
        out_shape=jax.ShapeDtypeStruct((B, 1, 128), jnp.float32),
        grid=(B, NL // TL, NT // TN),
        in_specs=[
            pl.BlockSpec((1, TL, H), lambda b, i, j: (b, i, 0)),          # a_l
            pl.BlockSpec((1, TN, H), lambda b, i, j: (b, j, 0)),          # b_p
            pl.BlockSpec((1, TL, 3), lambda b, i, j: (b, i, 0)),          # lig xyz
            pl.BlockSpec((None, NATOM, 3, TN), lambda b, i, j: (b, 0, 0, j)),  # pro xyz
            pl.BlockSpec((1, TL, 1), lambda b, i, j: (b, i, 0)),          # lig mask
            pl.BlockSpec((1, 1, TN), lambda b, i, j: (b, 0, j)),          # pro mask
            pl.BlockSpec((H, _HEAD_PAD), lambda b, i, j: (0, 0)),         # fused heads W
            pl.BlockSpec((1, _HEAD_PAD), lambda b, i, j: (0, 0)),         # fused heads b
        ],
        out_specs=pl.BlockSpec((1, 1, 128), lambda b, i, j: (b, 0, 0)),
        compiler_params=pltpu.CompilerParams(
            dimension_semantics=("parallel", "arbitrary", "arbitrary")),
    )(a_l, b_p, lig_pos, pro_pos_cn, lig_mask, pro_mask_row, w_heads, b_heads)
    return out[:, 0, 0]


# ---------------------------------------------------------------------------
# Parameter preparation (trace-time, outside kernels): fold eval-mode BN into
# the pair-MLP Linear and fuse/pad the three mixture heads.
# ---------------------------------------------------------------------------
def fold_bn_and_fuse_heads(params):
    scale = params["bn_g"] / jnp.sqrt(params["bn_v"] + BN_EPS)        # (1, H)
    w1a_f = params["w1a"] * scale
    w1b_f = params["w1b"] * scale
    b1_f = (params["b1"] - params["bn_m"]) * scale + params["bn_b"]
    g = NGAUSS
    w_heads = jnp.zeros((HID, _HEAD_PAD), jnp.float32)
    w_heads = w_heads.at[:, 0:g].set(params["wpi"])
    w_heads = w_heads.at[:, g:2 * g].set(params["wsig"])
    w_heads = w_heads.at[:, 2 * g:3 * g].set(params["wmu"])
    b_heads = jnp.zeros((1, _HEAD_PAD), jnp.float32)
    b_heads = b_heads.at[:, 0:g].set(params["bpi"])
    b_heads = b_heads.at[:, g:2 * g].set(params["bsig"])
    b_heads = b_heads.at[:, 2 * g:3 * g].set(params["bmu"])
    return w1a_f, w1b_f, b1_f, w_heads.astype(jnp.bfloat16), b_heads


def karmadock_scoring(lig_h, pro_h, lig_pos, pro_xyz_full, lig_mask, pro_mask,
                      params):
    """lig_h (B,NL,H), pro_h (B,NT,H), lig_pos (B,NL,3), pro_xyz_full (B,NT,24,3),
    lig_mask (B,NL,1), pro_mask (B,NT,1) -> per-complex MDN score (B,)."""
    B, NL, H = lig_h.shape
    NT = pro_h.shape[1]
    w1a_f, w1b_f, b1_f, w_heads, b_heads = fold_bn_and_fuse_heads(params)

    # Hoisted, batched, BN-folded pair-MLP projections (bf16 MXU).
    a_l = linear(lig_h.reshape(B * NL, H), w1a_f, b1_f).reshape(B, NL, H)
    b_p = linear(pro_h.reshape(B * NT, H), w1b_f,
                 jnp.zeros((1, H), jnp.float32)).reshape(B, NT, H)

    # Protein coords: atom-major, xyz-component next, residues on the lane axis.
    pro_pos_cn = jnp.transpose(pro_xyz_full, (0, 2, 3, 1))            # (B, 24, 3, NT)
    pro_mask_row = jnp.transpose(pro_mask, (0, 2, 1))                 # (B, 1, NT)

    return mdn_score(a_l, b_p, lig_pos, pro_pos_cn, lig_mask, pro_mask_row,
                     w_heads, b_heads)


if __name__ == "__main__":
    key = jax.random.PRNGKey(0)
    B, NL, NT = 2, 8, 8
    LIG_FEAT, PRO_SCALAR, N_AA = 89, 9, 21
    lig_counts = [7, 8]
    pro_counts = [8, 6]

    ks = jax.random.split(key, 8)
    lig_feat = jax.random.normal(ks[0], (B, NL, LIG_FEAT), jnp.float32)
    pro_scalar = jax.random.normal(ks[1], (B, NT, PRO_SCALAR), jnp.float32)
    pro_seq = jax.random.randint(ks[2], (B, NT), 0, N_AA)
    lig_pos = jax.random.normal(ks[3], (B, NL, 3), jnp.float32) * 2.0
    pro_xyz_full = jax.random.normal(ks[4], (B, NT, NATOM, 3), jnp.float32) * 2.0
    # KarmaDock pads missing full-atom slots with NaN -> must map to 10000.
    pro_xyz_full = pro_xyz_full.at[:, :, 20:, :].set(jnp.nan)

    lig_mask = (jnp.arange(NL)[None, :] < jnp.asarray(lig_counts)[:, None]
                ).astype(jnp.float32)[..., None]                      # (B, NL, 1)
    pro_mask = (jnp.arange(NT)[None, :] < jnp.asarray(pro_counts)[:, None]
                ).astype(jnp.float32)[..., None]                      # (B, NT, 1)

    def rnd(k, shape, scale=0.05):
        return jax.random.normal(k, shape, jnp.float32) * scale

    # --- encoder stand-ins (Pallas linear + SiLU) ---------------------------
    # TODO(synk): GraghTransformer / GVP_embedding stacks not translated.
    ek = jax.random.split(ks[5], 4)
    lig_in = jnp.pad(lig_feat.reshape(B * NL, LIG_FEAT),
                     ((0, 0), (0, HID - LIG_FEAT)))
    w_lig = rnd(ek[0], (HID, HID))
    b_lig = rnd(ek[1], (1, HID))
    lig_h = linear(lig_in, w_lig, b_lig, activation="silu"
                   ).reshape(B, NL, HID) * lig_mask

    pro_in = jnp.concatenate(
        [pro_scalar, jax.nn.one_hot(pro_seq, N_AA, dtype=jnp.float32)], axis=-1)
    pro_in = jnp.pad(pro_in.reshape(B * NT, PRO_SCALAR + N_AA),
                     ((0, 0), (0, HID - (PRO_SCALAR + N_AA))))
    w_pro = rnd(ek[2], (HID, HID))
    b_pro = rnd(ek[3], (1, HID))
    pro_h = linear(pro_in, w_pro, b_pro, activation="silu"
                   ).reshape(B, NT, HID) * pro_mask

    # --- MDN_Block parameters (synthetic deterministic init) ----------------
    pk = jax.random.split(ks[6], 13)
    params = dict(
        w1a=rnd(pk[0], (HID, HID)), w1b=rnd(pk[1], (HID, HID)),
        b1=rnd(pk[2], (1, HID)),
        bn_g=1.0 + rnd(pk[3], (1, HID)), bn_b=rnd(pk[4], (1, HID)),
        bn_m=rnd(pk[5], (1, HID)), bn_v=1.0 + jnp.abs(rnd(pk[6], (1, HID))),
        wpi=rnd(pk[7], (HID, NGAUSS)), bpi=rnd(pk[8], (1, NGAUSS)),
        wsig=rnd(pk[9], (HID, NGAUSS)), bsig=rnd(pk[10], (1, NGAUSS)),
        wmu=rnd(pk[11], (HID, NGAUSS)), bmu=rnd(pk[12], (1, NGAUSS)),
    )

    scores = karmadock_scoring(lig_h, pro_h, lig_pos, pro_xyz_full,
                               lig_mask, pro_mask, params)
    scores = jax.block_until_ready(scores)
    assert scores.shape == (B,)
    assert bool(jnp.all(jnp.isfinite(scores)))
    print("KERNEL_OK")
</pallas_src>

<mosaic_0001>
module attributes {stable_mosaic.version = 11 : i64} {
  func.func @kernel(%arg0: i32, %arg1: memref<16x128xbf16, #tpu.memory_space<vmem>>, %arg2: memref<128x128xbf16, #tpu.memory_space<vmem>>, %arg3: memref<1x128xf32, #tpu.memory_space<vmem>>, %arg4: memref<16x128xf32, #tpu.memory_space<vmem>>) attributes {dimension_semantics = [#tpu.dimension_semantics<parallel>], iteration_bounds = array<i64: 1>, scalar_prefetch = 0 : i64, scratch_operands = 0 : i64, tpu.core_type = #tpu.core_type<tc>, window_params = [{transform_indices = @transform_0, window_bounds = array<i64: 16, 128>}, {pipeline_mode = #tpu.pipeline_mode<synchronous>, transform_indices = @transform_1, window_bounds = array<i64: 128, 128>}, {pipeline_mode = #tpu.pipeline_mode<synchronous>, transform_indices = @transform_2, window_bounds = array<i64: 1, 128>}, {transform_indices = @transform_3, window_bounds = array<i64: 16, 128>}]} {
    %c0 = arith.constant 0 : index
    %c0_0 = arith.constant 0 : index
    %0 = vector.load %arg1[%c0, %c0_0] : memref<16x128xbf16, #tpu.memory_space<vmem>>, vector<16x128xbf16>
    %c0_1 = arith.constant 0 : index
    %c0_2 = arith.constant 0 : index
    %1 = vector.load %arg2[%c0_1, %c0_2] : memref<128x128xbf16, #tpu.memory_space<vmem>>, vector<128x128xbf16>
    %cst = arith.constant dense<0.000000e+00> : vector<16x128xf32>
    %2 = tpu.matmul %0, %1, %cst {dimension_numbers = #tpu.dot_dimension_numbers<[1], [0], [0], [1], [0, 0, 1, 1], [], []>} : vector<16x128xbf16>, vector<128x128xbf16>, vector<16x128xf32> -> vector<16x128xf32>
    %c0_3 = arith.constant 0 : index
    %c0_4 = arith.constant 0 : index
    %3 = vector.load %arg3[%c0_3, %c0_4] : memref<1x128xf32, #tpu.memory_space<vmem>>, vector<1x128xf32>
    %4 = vector.broadcast %3 : vector<1x128xf32> to vector<16x128xf32>
    %5 = arith.addf %2, %4 : vector<16x128xf32>
    %6 = arith.negf %5 : vector<16x128xf32>
    %7 = math.exp %6 : vector<16x128xf32>
    %cst_5 = arith.constant 1.000000e+00 : f32
    %8 = vector.broadcast %cst_5 : f32 to vector<16x128xf32>
    %9 = arith.addf %8, %7 : vector<16x128xf32>
    %10 = arith.divf %8, %9 : vector<16x128xf32>
    %11 = arith.mulf %5, %10 : vector<16x128xf32>
    %c0_6 = arith.constant 0 : index
    %c0_7 = arith.constant 0 : index
    %12 = vector.load %arg4[%c0_6, %c0_7] : memref<16x128xf32, #tpu.memory_space<vmem>>, vector<16x128xf32>
    tpu.vector_store %arg4[%c0_6, %c0_7], %11 {strides = array<i32>} : memref<16x128xf32, #tpu.memory_space<vmem>>, vector<16x128xf32>,
    return
  }
  func.func @transform_0(%arg0: i32) -> (i32, i32) {
    %c0_i32 = arith.constant 0 : i32
    %c0_i32_0 = arith.constant 0 : i32
    return %arg0, %c0_i32 : i32, i32
  }
  func.func @transform_1(%arg0: i32) -> (i32, i32) {
    %c0_i32 = arith.constant 0 : i32
    %c0_i32_0 = arith.constant 0 : i32
    %c0_i32_1 = arith.constant 0 : i32
    return %c0_i32, %c0_i32_0 : i32, i32
  }
  func.func @transform_2(%arg0: i32) -> (i32, i32) {
    %c0_i32 = arith.constant 0 : i32
    %c0_i32_0 = arith.constant 0 : i32
    %c0_i32_1 = arith.constant 0 : i32
    return %c0_i32, %c0_i32_0 : i32, i32
  }
  func.func @transform_3(%arg0: i32) -> (i32, i32) {
    %c0_i32 = arith.constant 0 : i32
    %c0_i32_0 = arith.constant 0 : i32
    return %arg0, %c0_i32 : i32, i32
  }
}

</mosaic_0001>

<llo_original>
// kernel: tpu_custom_call.1
$region0: #{tpu_custom_call.1}
  #allocation0 [shape = 'u32[]', space=smem, size = 0x4, offset = 0x4, fixed_abs, tag = 'smem constant byte address 0x4 - core index']
  #allocation1 [shape = 'u32[144,128]{1,0:T(1,128)}', space=vmem, size = 0x12000, scoped, tag = 'internal scratch']
  %s0 = inlined_call_operand.hbm [shape: bf16[16,128], index: 0, kind: input, shape index: {}]
  %s1 = inlined_call_operand.hbm [shape: bf16[128,128], index: 1, kind: input, shape index: {}]
  %s2 = inlined_call_operand.vmem [shape: f32[1,128], index: 2, kind: input, shape index: {}]
  %s3 = inlined_call_operand.hbm [shape: f32[16,128], index: 3, kind: output, shape index: {}]
  %s4 = sld [smem:[#allocation0]]
  $region30: #{tpu_custom_call.1} parent=0
    _
  %s6 = ssub.s32 1, %s4
  %s7 = scalar_select 0, %s6, %s4
  $region1: #{tpu_custom_call.1} parent=0
    #allocation2 [shape = 'u8[4096]{0}', space=vmem, size = 0x1000, scoped, tag = 'input window, operand 0, single buffered']
    #allocation3 [shape = 's32[1]{0}', space=sflag, size = 0x4, scoped, tag = 'scoped memory for tpu_custom_call.1']
    #allocation4 [shape = 's32[1]{0}', space=sflag, size = 0x4, scoped, tag = 'scoped memory for tpu_custom_call.1']
    #allocation5 [shape = 'u8[32768]{0}', space=vmem, size = 0x8000, scoped, tag = 'input window, operand 1, single buffered']
    #allocation6 [shape = 's32[1]{0}', space=sflag, size = 0x4, scoped, tag = 'scoped memory for tpu_custom_call.1']
    #allocation7 [shape = 'u8[8192]{0}', space=vmem, size = 0x2000, scoped, tag = 'output window, operand 0, single buffered']
    %8 = vsyncpa [#allocation3], 0
    %9 = vsyncpa [#allocation6], 0
    %10 = vsyncpa [#allocation4], 0
    // Predicated region
    $region2: #{tpu_custom_call.1} parent=1 // pred_check
      _
    $region3: #{tpu_custom_call.1} parent=1 // pred_check_branch
      %12 = sbr.rel (0) target = $region5
    $region4: #{tpu_custom_call.1} parent=1 // pred_region
      %s14 = ssub.s32 128, 128
      %15 = vsyncadd [#allocation3], %s14
      %s16 = sshll.u32 [#allocation2], 4
      %s17 = int_to_ptr.vmem [resolvable:$true] %s16
      %22 = dma.hbm_to_vmem [thread:$0]  %s0, 128, %s17, [#allocation3], 64, 64, 4
    $region5: #{tpu_custom_call.1} parent=1 // pred_fallthru
      _
    // Predicated region
    $region6: #{tpu_custom_call.1} parent=1 // pred_check
      _
    $region7: #{tpu_custom_call.1} parent=1 // pred_check_branch
      %24 = sbr.rel (0) target = $region9
    $region8: #{tpu_custom_call.1} parent=1 // pred_region
      %s26 = ssub.s32 1024, 1024
      %27 = vsyncadd [#allocation6], %s26
      %s28 = sshll.u32 [#allocation5], 4
      %s29 = int_to_ptr.vmem [resolvable:$true] %s28
      %34 = dma.hbm_to_vmem [thread:$0]  %s1, 1024, %s29, [#allocation6], 64, 64, 4
    $region9: #{tpu_custom_call.1} parent=1 // pred_fallthru
      _
    // Predicated region
    $region10: #{tpu_custom_call.1} parent=1 // pred_check
      _
    $region11: #{tpu_custom_call.1} parent=1 // pred_check_branch
      %36 = sbr.rel (0) target = $region13
    $region12: #{tpu_custom_call.1} parent=1 // pred_region
      _
    $region13: #{tpu_custom_call.1} parent=1 // pred_fallthru
      _
    // Predicated region
    $region14: #{tpu_custom_call.1} parent=1 // pred_check
      _
    $region15: #{tpu_custom_call.1} parent=1 // pred_check_branch
      %38 = sbr.rel (0) target = $region17
    $region16: #{tpu_custom_call.1} parent=1 // pred_region
      %39 = dma.done [#allocation3], 128
    $region17: #{tpu_custom_call.1} parent=1 // pred_fallthru
      _
    // Predicated region
    $region18: #{tpu_custom_call.1} parent=1 // pred_check
      _
    $region19: #{tpu_custom_call.1} parent=1 // pred_check_branch
      %41 = sbr.rel (0) target = $region21
    $region20: #{tpu_custom_call.1} parent=1 // pred_region
      %42 = dma.done [#allocation6], 1024
    $region21: #{tpu_custom_call.1} parent=1 // pred_fallthru
      _
    %v44 = vld [vmem:[#allocation2] sm:$0xf]
    %v45 = vld [vmem:[#allocation2 + $0x4] sm:$0xf]
    %v46 = vld [vmem:[#allocation5] sm:$0xf]
    %v47 = vld [vmem:[#allocation5 + $0x4] sm:$0xf]
    %v48 = vld [vmem:[#allocation5 + $0x8] sm:$0xf]
    %v49 = vld [vmem:[#allocation5 + $0xc] sm:$0xf]
    %v50 = vld [vmem:[#allocation5 + $0x10] sm:$0xf]
    %v51 = vld [vmem:[#allocation5 + $0x14] sm:$0xf]
    %v52 = vld [vmem:[#allocation5 + $0x18] sm:$0xf]
    %v53 = vld [vmem:[#allocation5 + $0x1c] sm:$0xf]
    %v54 = vld [vmem:[#allocation5 + $0x20] sm:$0xf]
    %v55 = vld [vmem:[#allocation5 + $0x24] sm:$0xf]
    %v56 = vld [vmem:[#allocation5 + $0x28] sm:$0xf]
    %v57 = vld [vmem:[#allocation5 + $0x2c] sm:$0xf]
    %v58 = vld [vmem:[#allocation5 + $0x30] sm:$0xf]
    %v59 = vld [vmem:[#allocation5 + $0x34] sm:$0xf]
    %v60 = vld [vmem:[#allocation5 + $0x38] sm:$0xf]
    %v61 = vld [vmem:[#allocation5 + $0x3c] sm:$0xf]
    %v62 = vld [vmem:[%s2] sm:$0x1]
    %v64 = vlaneseq
    %v65 = vshrl.u32 %v64, 7
    %v66 = vsub.s32 0, %v65
    %v67 = vrot.slane %v62, %v66
    %v71 = vunpack.c.l.b16 %v44
    %v72 = vunpack.c.l.b16 %v45
    %v73 = vpack.c.b16 %v72, %v71
    %v91 = vunpack.c.l.b16 %v46
    %v92 = vunpack.c.l.b16 %v47
    %v93 = vunpack.c.l.b16 %v48
    %v94 = vunpack.c.l.b16 %v49
    %v95 = vunpack.c.l.b16 %v50
    %v96 = vunpack.c.l.b16 %v51
    %v97 = vunpack.c.l.b16 %v52
    %v98 = vunpack.c.l.b16 %v53
    %v99 = vunpack.c.l.b16 %v54
    %v100 = vunpack.c.l.b16 %v55
    %v101 = vunpack.c.l.b16 %v56
    %v102 = vunpack.c.l.b16 %v57
    %v103 = vunpack.c.l.b16 %v58
    %v104 = vunpack.c.l.b16 %v59
    %v105 = vunpack.c.l.b16 %v60
    %v106 = vunpack.c.l.b16 %v61
    %v107 = vpack.c.b16 %v92, %v91
    %v108 = vpack.c.b16 %v94, %v93
    %v109 = vpack.c.b16 %v96, %v95
    %v110 = vpack.c.b16 %v98, %v97
    %v111 = vpack.c.b16 %v100, %v99
    %v112 = vpack.c.b16 %v102, %v101
    %v113 = vpack.c.b16 %v104, %v103
    %v114 = vpack.c.b16 %v106, %v105
    %123 = vmatprep.subr.bf16.mxu0 0
    %124 = vmatpush1.bf16.msra.mxu0 %v114
    %125 = vmatprep.subr.bf16.mxu0 0
    %126 = vmatpush1.bf16.msra.mxu0 %v113
    %127 = vmatprep.subr.bf16.mxu0 0
    %128 = vmatpush1.bf16.msra.mxu0 %v112
    %129 = vmatprep.subr.bf16.mxu0 0
    %130 = vmatpush1.bf16.msra.mxu0 %v111
    %131 = vmatprep.subr.bf16.mxu0 0
    %132 = vmatpush1.bf16.msra.mxu0 %v110
    %133 = vmatprep.subr.bf16.mxu0 0
    %134 = vmatpush1.bf16.msra.mxu0 %v109
    %135 = vmatprep.subr.bf16.mxu0 0
    %136 = vmatpush1.bf16.msra.mxu0 %v108
    %137 = vmatprep.subr.bf16.mxu0 0
    %138 = vmatpush1.bf16.msra.mxu0 %v107
    %139 = vmatprep.subr.bf16.mxu0 0
    %140 = vmatpush2.bf16.msra.mxu0 0
    %141 = vmatprep.subr.bf16.mxu0 0
    %142 = vmatpush2.bf16.msra.mxu0 0
    %143 = vmatprep.subr.bf16.mxu0 0
    %144 = vmatpush2.bf16.msra.mxu0 0
    %145 = vmatprep.subr.bf16.mxu0 0
    %146 = vmatpush2.bf16.msra.mxu0 0
    %147 = vmatprep.subr.bf16.mxu0 0
    %148 = vmatpush2.bf16.msra.mxu0 0
    %149 = vmatprep.subr.bf16.mxu0 0
    %150 = vmatpush2.bf16.msra.mxu0 0
    %151 = vmatprep.subr.bf16.mxu0 0
    %152 = vmatpush2.bf16.msra.mxu0 0
    %153 = vmatprep.subr.bf16.mxu0 0
    %154 = vmatpush2.bf16.msra.mxu0 0
    %155 = vmatprep.mubr.bf16.mxu0 0
    %156 = vmatmul.mubr.bf16.gmra.mxu0 %v73
    %v157 = vpop.f32.mrf.mxu0
    %v158 = vadd.f32 %v67, %v157
    %v159 = vpop.f32.mrf.mxu0
    %v160 = vpop.f32.mrf.mxu0
    %v161 = vadd.f32 %v67, %v160
    %v162 = vpop.f32.mrf.mxu0
    %163 = vdwg.mxu0
    %v164 = vxor.u32 %v158, 2147483648
    %v165 = vxor.u32 %v161, 2147483648
    %v166 = vmul.f32 %v164, 1.442695
    %v167 = vpow.pop %v166
    %v168 = vmul.f32 %v165, 1.442695
    %v169 = vpow.pop %v168
    %v170 = vadd.f32 %v167, 1.0
    %v171 = vadd.f32 %v169, 1.0
    %v172 = vrcp.pop %v170
    %v173 = vmul.f32 1.0, %v172
    %v174 = vrcp.pop %v171
    %v175 = vmul.f32 1.0, %v174
    %v176 = vmul.f32 %v158, %v173
    %v177 = vmul.f32 %v161, %v175
    %178 = vst [vmem:[#allocation7] sm:$0xff] %v176
    %179 = vst [vmem:[#allocation7 + $0x8] sm:$0xff] %v177
    // Predicated region
    $region22: #{tpu_custom_call.1} parent=1 // pred_check
      _
    $region23: #{tpu_custom_call.1} parent=1 // pred_check_branch
      %181 = sbr.rel (0) target = $region25
    $region24: #{tpu_custom_call.1} parent=1 // pred_region
      %s183 = ssub.s32 256, 256
      %184 = vsyncadd [#allocation4], %s183
      %s185 = sshll.u32 [#allocation7], 4
      %s186 = int_to_ptr.vmem [resolvable:$true] %s185
      %191 = dma.vmem_to_hbm [thread:$0]  %s186, 256, %s3, [#allocation4], 128, 128, 8
    $region25: #{tpu_custom_call.1} parent=1 // pred_fallthru
      _
    // Predicated region
    $region26: #{tpu_custom_call.1} parent=1 // pred_check
      _
    $region27: #{tpu_custom_call.1} parent=1 // pred_check_branch
      %193 = sbr.rel (0) target = $region29
    $region28: #{tpu_custom_call.1} parent=1 // pred_region
      %194 = dma.done [#allocation4], 256
    $region29: #{tpu_custom_call.1} parent=1 // pred_fallthru
      _
    %195 = vsyncpa [#allocation3], 1
    %196 = vsyncpa [#allocation6], 1
    %197 = vsyncpa [#allocation4], 1

</llo_original>
